<compile_context>
chip_gen: v6e
topology: v6e:2x2x1
jax: 0.10.0
libtpu: 0.0.40
codegen_flags: <defaults>
</compile_context>

<pallas_src>
import jax
import jax.numpy as jnp
from jax.experimental import pallas as pl
from jax.experimental.pallas import tpu as pltpu


def _round_up(a, m):
    return -(-a // m) * m


def _independence_kernel(
    x_ref, w1_ref, b1_ref,            # linear_layer
    e_ref, b2k_ref, w3k_ref, b3k_ref, # channel MLP (expansion / mixing), MXU-structured
    s_ref,                            # reduction over C
    w4_ref, b4_ref, w5_ref, b5_ref,   # classifier (padded to 128 lanes)
    out_ref,
):
    f32 = jnp.float32

    # --- linear_layer + relu : (tb, D) @ (D, H) -> (tb, H) ---
    y = jnp.dot(x_ref[...], w1_ref[...], preferred_element_type=f32)
    y = jnp.maximum(y + b1_ref[...], 0.0)

    # --- channel MLP on the MXU ---
    # expansion: a[b, h*C+c] = relu(y[b,h] * w2[c] + b2[c])
    a = jnp.dot(y, e_ref[...], preferred_element_type=f32)
    a = jnp.maximum(a + b2k_ref[...], 0.0)                     # (tb, P)
    # mixing:    z[b, h*C+o] = relu(sum_c a[b,h*C+c]*w3[o,c] + b3[o])
    z = jnp.dot(a, w3k_ref[...], preferred_element_type=f32)
    z = jnp.maximum(z + b3k_ref[...], 0.0)                     # (tb, P)
    # reduction over C, then outer relu (identity on the nonneg sum, kept for
    # exact semantic match) + dropout(eval) == identity
    feat = jnp.dot(z, s_ref[...], preferred_element_type=f32)  # (tb, H)
    feat = jnp.maximum(feat, 0.0)

    # --- classifier: Linear(H, M) -> relu -> Linear(M, K), 128-lane padded ---
    h = jnp.dot(feat, w4_ref[...], preferred_element_type=f32)
    h = jnp.maximum(h + b4_ref[...], 0.0)                      # (tb, Mp)
    out = jnp.dot(h, w5_ref[...], preferred_element_type=f32)
    out_ref[...] = (out + b5_ref[...]).astype(out_ref.dtype)   # (tb, Kp) unmasked store


def pack_params(params, *, lane=128):
    """Build the MXU-structured (kron) weights once, outside the kernel."""
    w1t, b1 = params["w1t"], params["b1"]          # (D,H), (1,H)
    w2, b2 = params["w2"], params["b2"]            # (C,),  (C,)
    w3, b3 = params["w3"], params["b3"]            # (C,C) row-major (out,in), (C,)
    w4t, b4 = params["w4t"], params["b4"]          # (H,M), (1,M)
    w5t, b5 = params["w5t"], params["b5"]          # (M,K), (1,K)

    D, H = w1t.shape
    C = w2.shape[0]
    M = w4t.shape[1]
    K = w5t.shape[1]

    HC = H * C
    P = _round_up(HC, lane)        # lane width of the channel-MLP slabs (256 for H=32,C=8)
    Mp = _round_up(M, lane)        # padded hidden width  -> lane-dense intermediate
    Kp = _round_up(K, lane)        # padded output width  -> unmasked 128-lane store

    eyeH = jnp.eye(H, dtype=jnp.float32)

    # expansion E[h, h*C + c] = w2[c]
    E = jnp.kron(eyeH, w2.reshape(1, C))                       # (H, HC)
    E = jnp.pad(E, ((0, 0), (0, P - HC)))
    b2k = jnp.pad(jnp.tile(b2, H).reshape(1, HC), ((0, 0), (0, P - HC)))

    # mixing W3k[h*C + c, h*C + o] = w3[o, c]  (block-diagonal kron(I_H, w3^T))
    W3k = jnp.kron(eyeH, w3.T)                                 # (HC, HC)
    W3k = jnp.pad(W3k, ((0, P - HC), (0, P - HC)))
    b3k = jnp.pad(jnp.tile(b3, H).reshape(1, HC), ((0, 0), (0, P - HC)))

    # reduction S[h*C + o, h] = 1  (sum over C back to H features)
    S = jnp.kron(eyeH, jnp.ones((C, 1), jnp.float32))          # (HC, H)
    S = jnp.pad(S, ((0, P - HC), (0, 0)))

    # classifier, zero-padded to 128-lane widths (padding provably contributes 0)
    w4p = jnp.pad(w4t, ((0, 0), (0, Mp - M)))
    b4p = jnp.pad(b4, ((0, 0), (0, Mp - M)))
    w5p = jnp.pad(w5t, ((0, Mp - M), (0, Kp - K)))
    b5p = jnp.pad(b5, ((0, 0), (0, Kp - K)))

    packed = dict(w1=w1t, b1=b1, E=E, b2k=b2k, W3k=W3k, b3k=b3k, S=S,
                  w4=w4p, b4=b4p, w5=w5p, b5=b5p)
    meta = dict(D=D, H=H, C=C, M=M, K=K, P=P, Mp=Mp, Kp=Kp)
    return packed, meta


def independence_forward(x, packed, meta, *, tb=1024):
    """tb = max batch rows per grid step (large to amortize per-step overhead)."""
    B, D = x.shape
    K, Kp = meta["K"], meta["Kp"]
    x = x.astype(jnp.float32)

    # Batch tile: as large as possible (>=512 rows reaches ~85% of HBM roofline),
    # but capped so the grid has >=2 "parallel" steps whenever B >= 16, so v7x's
    # second TensorCore is used; sublane-aligned (multiple of 8).
    if B <= 8:
        tbe = B
    else:
        tbe = min(tb, B)
        if B >= 16:
            tbe = min(tbe, _round_up(pl.cdiv(B, 2), 8))
        tbe = max(8, (tbe // 8) * 8)
    grid = (pl.cdiv(B, tbe),)
    # NOTE: when B % tbe != 0 the trailing block computes on Pallas's padded rows;
    # those rows never reach the sliced output, so any garbage there is benign.

    const = lambda arr: pl.BlockSpec(arr.shape, lambda i: (0, 0))

    out = pl.pallas_call(
        _independence_kernel,
        out_shape=jax.ShapeDtypeStruct((B, Kp), jnp.float32),
        grid=grid,
        in_specs=[
            pl.BlockSpec((tbe, D), lambda i: (i, 0)),   # x (batch-tiled)
            const(packed["w1"]), const(packed["b1"]),
            const(packed["E"]), const(packed["b2k"]),
            const(packed["W3k"]), const(packed["b3k"]),
            const(packed["S"]),
            const(packed["w4"]), const(packed["b4"]),
            const(packed["w5"]), const(packed["b5"]),
        ],
        out_specs=pl.BlockSpec((tbe, Kp), lambda i: (i, 0)),    # 128-lane dense store
        compiler_params=pltpu.CompilerParams(dimension_semantics=("parallel",)),
    )(
        x, packed["w1"], packed["b1"],
        packed["E"], packed["b2k"], packed["W3k"], packed["b3k"], packed["S"],
        packed["w4"], packed["b4"], packed["w5"], packed["b5"],
    )
    return out[:, :K]


def reference_forward(x, p):
    """Pure-JAX reference (mirrors the PyTorch forward, eval mode)."""
    y = jnp.maximum(x @ p["w1t"] + p["b1"], 0.0)                        # (B, H)
    z = y[..., None] * p["w2"][None, None, :] + p["b2"][None, None, :]  # (B, H, C)
    z = jnp.maximum(z, 0.0)
    z = jnp.einsum("bhc,oc->bho", z, p["w3"]) + p["b3"][None, None, :]  # (B, H, C)
    z = jnp.maximum(z, 0.0)
    feat = jnp.maximum(z.sum(-1), 0.0)                                  # (B, H)
    h = jnp.maximum(feat @ p["w4t"] + p["b4"], 0.0)                     # (B, M)
    return h @ p["w5t"] + p["b5"]                                       # (B, K)


def init_params(key, input_dim, hidden_dim, class_number, channel):
    M = max(int(hidden_dim * 0.88), class_number)
    ks = jax.random.split(key, 10)
    u = lambda k, shape, fan: jax.random.uniform(
        k, shape, jnp.float32, -1.0 / jnp.sqrt(fan), 1.0 / jnp.sqrt(fan))
    return {
        # linear_layer: Linear(input_dim, hidden_dim) stored transposed (D, H)
        "w1t": u(ks[0], (input_dim, hidden_dim), input_dim),
        "b1":  u(ks[1], (1, hidden_dim), input_dim),
        # encoder Linear(1, C): weight (C, 1) -> vector (C,)
        "w2":  u(ks[2], (channel,), 1),
        "b2":  u(ks[3], (channel,), 1),
        # encoder Linear(C, C): weight (out, in) = (C, C)
        "w3":  u(ks[4], (channel, channel), channel),
        "b3":  u(ks[5], (channel,), channel),
        # classifier Linear(H, M) transposed, Linear(M, K) transposed
        "w4t": u(ks[6], (hidden_dim, M), hidden_dim),
        "b4":  u(ks[7], (1, M), hidden_dim),
        "w5t": u(ks[8], (M, class_number), M),
        "b5":  u(ks[9], (1, class_number), M),
    }


if __name__ == "__main__":
    B, input_dim, hidden_dim, class_number, channel = 16, 64, 32, 16, 8

    key = jax.random.PRNGKey(0)
    k_x, k_p = jax.random.split(key)
    x = jax.random.normal(k_x, (B, input_dim), jnp.float32)
    params = init_params(k_p, input_dim, hidden_dim, class_number, channel)

    packed, meta = pack_params(params)
    out = independence_forward(x, packed, meta, tb=1024)
    out = jax.block_until_ready(out)

    ref = reference_forward(x, params)
    assert out.shape == (B, class_number)
    assert jnp.allclose(out, ref, atol=5e-4, rtol=5e-4), (
        f"max err {jnp.max(jnp.abs(out - ref))}")

    print("KERNEL_OK")
</pallas_src>

<mosaic_0001>
module attributes {stable_mosaic.version = 11 : i64} {
  func.func @_independence_kernel(%arg0: i32, %arg1: memref<8x64xf32, #tpu.memory_space<vmem>>, %arg2: memref<64x32xf32, #tpu.memory_space<vmem>>, %arg3: memref<1x32xf32, #tpu.memory_space<vmem>>, %arg4: memref<32x256xf32, #tpu.memory_space<vmem>>, %arg5: memref<1x256xf32, #tpu.memory_space<vmem>>, %arg6: memref<256x256xf32, #tpu.memory_space<vmem>>, %arg7: memref<1x256xf32, #tpu.memory_space<vmem>>, %arg8: memref<256x32xf32, #tpu.memory_space<vmem>>, %arg9: memref<32x128xf32, #tpu.memory_space<vmem>>, %arg10: memref<1x128xf32, #tpu.memory_space<vmem>>, %arg11: memref<128x128xf32, #tpu.memory_space<vmem>>, %arg12: memref<1x128xf32, #tpu.memory_space<vmem>>, %arg13: memref<8x128xf32, #tpu.memory_space<vmem>>) attributes {dimension_semantics = [#tpu.dimension_semantics<parallel>], iteration_bounds = array<i64: 2>, scalar_prefetch = 0 : i64, scratch_operands = 0 : i64, tpu.core_type = #tpu.core_type<tc>, window_params = [{transform_indices = @transform_0, window_bounds = array<i64: 8, 64>}, {pipeline_mode = #tpu.pipeline_mode<synchronous>, transform_indices = @transform_1, window_bounds = array<i64: 64, 32>}, {pipeline_mode = #tpu.pipeline_mode<synchronous>, transform_indices = @transform_2, window_bounds = array<i64: 1, 32>}, {pipeline_mode = #tpu.pipeline_mode<synchronous>, transform_indices = @transform_3, window_bounds = array<i64: 32, 256>}, {pipeline_mode = #tpu.pipeline_mode<synchronous>, transform_indices = @transform_4, window_bounds = array<i64: 1, 256>}, {pipeline_mode = #tpu.pipeline_mode<synchronous>, transform_indices = @transform_5, window_bounds = array<i64: 256, 256>}, {pipeline_mode = #tpu.pipeline_mode<synchronous>, transform_indices = @transform_6, window_bounds = array<i64: 1, 256>}, {pipeline_mode = #tpu.pipeline_mode<synchronous>, transform_indices = @transform_7, window_bounds = array<i64: 256, 32>}, {pipeline_mode = #tpu.pipeline_mode<synchronous>, transform_indices = @transform_8, window_bounds = array<i64: 32, 128>}, {pipeline_mode = #tpu.pipeline_mode<synchronous>, transform_indices = @transform_9, window_bounds = array<i64: 1, 128>}, {pipeline_mode = #tpu.pipeline_mode<synchronous>, transform_indices = @transform_10, window_bounds = array<i64: 128, 128>}, {pipeline_mode = #tpu.pipeline_mode<synchronous>, transform_indices = @transform_11, window_bounds = array<i64: 1, 128>}, {transform_indices = @transform_12, window_bounds = array<i64: 8, 128>}]} {
    %c0 = arith.constant 0 : index
    %c0_0 = arith.constant 0 : index
    %0 = vector.load %arg1[%c0, %c0_0] : memref<8x64xf32, #tpu.memory_space<vmem>>, vector<8x64xf32>
    %c0_1 = arith.constant 0 : index
    %c0_2 = arith.constant 0 : index
    %1 = vector.load %arg2[%c0_1, %c0_2] : memref<64x32xf32, #tpu.memory_space<vmem>>, vector<64x32xf32>
    %cst = arith.constant dense<0.000000e+00> : vector<8x32xf32>
    %2 = tpu.matmul %0, %1, %cst {dimension_numbers = #tpu.dot_dimension_numbers<[1], [0], [0], [1], [0, 0, 1, 1], [], []>} : vector<8x64xf32>, vector<64x32xf32>, vector<8x32xf32> -> vector<8x32xf32>
    %c0_3 = arith.constant 0 : index
    %c0_4 = arith.constant 0 : index
    %3 = vector.load %arg3[%c0_3, %c0_4] : memref<1x32xf32, #tpu.memory_space<vmem>>, vector<1x32xf32>
    %4 = vector.broadcast %3 : vector<1x32xf32> to vector<8x32xf32>
    %5 = arith.addf %2, %4 : vector<8x32xf32>
    %cst_5 = arith.constant 0.000000e+00 : f32
    %6 = vector.broadcast %cst_5 : f32 to vector<8x32xf32>
    %7 = arith.maximumf %5, %6 : vector<8x32xf32>
    %c0_6 = arith.constant 0 : index
    %c0_7 = arith.constant 0 : index
    %8 = vector.load %arg4[%c0_6, %c0_7] : memref<32x256xf32, #tpu.memory_space<vmem>>, vector<32x256xf32>
    %cst_8 = arith.constant dense<0.000000e+00> : vector<8x256xf32>
    %9 = tpu.matmul %7, %8, %cst_8 {dimension_numbers = #tpu.dot_dimension_numbers<[1], [0], [0], [1], [0, 0, 1, 1], [], []>} : vector<8x32xf32>, vector<32x256xf32>, vector<8x256xf32> -> vector<8x256xf32>
    %c0_9 = arith.constant 0 : index
    %c0_10 = arith.constant 0 : index
    %10 = vector.load %arg5[%c0_9, %c0_10] : memref<1x256xf32, #tpu.memory_space<vmem>>, vector<1x256xf32>
    %11 = vector.broadcast %10 : vector<1x256xf32> to vector<8x256xf32>
    %12 = arith.addf %9, %11 : vector<8x256xf32>
    %cst_11 = arith.constant 0.000000e+00 : f32
    %13 = vector.broadcast %cst_11 : f32 to vector<8x256xf32>
    %14 = arith.maximumf %12, %13 : vector<8x256xf32>
    %c0_12 = arith.constant 0 : index
    %c0_13 = arith.constant 0 : index
    %15 = vector.load %arg6[%c0_12, %c0_13] : memref<256x256xf32, #tpu.memory_space<vmem>>, vector<256x256xf32>
    %cst_14 = arith.constant dense<0.000000e+00> : vector<8x256xf32>
    %16 = tpu.matmul %14, %15, %cst_14 {dimension_numbers = #tpu.dot_dimension_numbers<[1], [0], [0], [1], [0, 0, 1, 1], [], []>} : vector<8x256xf32>, vector<256x256xf32>, vector<8x256xf32> -> vector<8x256xf32>
    %c0_15 = arith.constant 0 : index
    %c0_16 = arith.constant 0 : index
    %17 = vector.load %arg7[%c0_15, %c0_16] : memref<1x256xf32, #tpu.memory_space<vmem>>, vector<1x256xf32>
    %18 = vector.broadcast %17 : vector<1x256xf32> to vector<8x256xf32>
    %19 = arith.addf %16, %18 : vector<8x256xf32>
    %cst_17 = arith.constant 0.000000e+00 : f32
    %20 = vector.broadcast %cst_17 : f32 to vector<8x256xf32>
    %21 = arith.maximumf %19, %20 : vector<8x256xf32>
    %c0_18 = arith.constant 0 : index
    %c0_19 = arith.constant 0 : index
    %22 = vector.load %arg8[%c0_18, %c0_19] : memref<256x32xf32, #tpu.memory_space<vmem>>, vector<256x32xf32>
    %cst_20 = arith.constant dense<0.000000e+00> : vector<8x32xf32>
    %23 = tpu.matmul %21, %22, %cst_20 {dimension_numbers = #tpu.dot_dimension_numbers<[1], [0], [0], [1], [0, 0, 1, 1], [], []>} : vector<8x256xf32>, vector<256x32xf32>, vector<8x32xf32> -> vector<8x32xf32>
    %cst_21 = arith.constant 0.000000e+00 : f32
    %24 = vector.broadcast %cst_21 : f32 to vector<8x32xf32>
    %25 = arith.maximumf %23, %24 : vector<8x32xf32>
    %c0_22 = arith.constant 0 : index
    %c0_23 = arith.constant 0 : index
    %26 = vector.load %arg9[%c0_22, %c0_23] : memref<32x128xf32, #tpu.memory_space<vmem>>, vector<32x128xf32>
    %cst_24 = arith.constant dense<0.000000e+00> : vector<8x128xf32>
    %27 = tpu.matmul %25, %26, %cst_24 {dimension_numbers = #tpu.dot_dimension_numbers<[1], [0], [0], [1], [0, 0, 1, 1], [], []>} : vector<8x32xf32>, vector<32x128xf32>, vector<8x128xf32> -> vector<8x128xf32>
    %c0_25 = arith.constant 0 : index
    %c0_26 = arith.constant 0 : index
    %28 = vector.load %arg10[%c0_25, %c0_26] : memref<1x128xf32, #tpu.memory_space<vmem>>, vector<1x128xf32>
    %29 = vector.broadcast %28 : vector<1x128xf32> to vector<8x128xf32>
    %30 = arith.addf %27, %29 : vector<8x128xf32>
    %cst_27 = arith.constant 0.000000e+00 : f32
    %31 = vector.broadcast %cst_27 : f32 to vector<8x128xf32>
    %32 = arith.maximumf %30, %31 : vector<8x128xf32>
    %c0_28 = arith.constant 0 : index
    %c0_29 = arith.constant 0 : index
    %33 = vector.load %arg11[%c0_28, %c0_29] : memref<128x128xf32, #tpu.memory_space<vmem>>, vector<128x128xf32>
    %cst_30 = arith.constant dense<0.000000e+00> : vector<8x128xf32>
    %34 = tpu.matmul %32, %33, %cst_30 {dimension_numbers = #tpu.dot_dimension_numbers<[1], [0], [0], [1], [0, 0, 1, 1], [], []>} : vector<8x128xf32>, vector<128x128xf32>, vector<8x128xf32> -> vector<8x128xf32>
    %c0_31 = arith.constant 0 : index
    %c0_32 = arith.constant 0 : index
    %35 = vector.load %arg12[%c0_31, %c0_32] : memref<1x128xf32, #tpu.memory_space<vmem>>, vector<1x128xf32>
    %36 = vector.broadcast %35 : vector<1x128xf32> to vector<8x128xf32>
    %37 = arith.addf %34, %36 : vector<8x128xf32>
    %c0_33 = arith.constant 0 : index
    %c0_34 = arith.constant 0 : index
    %38 = vector.load %arg13[%c0_33, %c0_34] : memref<8x128xf32, #tpu.memory_space<vmem>>, vector<8x128xf32>
    tpu.vector_store %arg13[%c0_33, %c0_34], %37 {strides = array<i32>} : memref<8x128xf32, #tpu.memory_space<vmem>>, vector<8x128xf32>,
    return
  }
  func.func @transform_0(%arg0: i32) -> (i32, i32) {
    %c0_i32 = arith.constant 0 : i32
    %c0_i32_0 = arith.constant 0 : i32
    return %arg0, %c0_i32 : i32, i32
  }
  func.func @transform_1(%arg0: i32) -> (i32, i32) {
    %c0_i32 = arith.constant 0 : i32
    %c0_i32_0 = arith.constant 0 : i32
    %c0_i32_1 = arith.constant 0 : i32
    return %c0_i32, %c0_i32_0 : i32, i32
  }
  func.func @transform_2(%arg0: i32) -> (i32, i32) {
    %c0_i32 = arith.constant 0 : i32
    %c0_i32_0 = arith.constant 0 : i32
    %c0_i32_1 = arith.constant 0 : i32
    return %c0_i32, %c0_i32_0 : i32, i32
  }
  func.func @transform_3(%arg0: i32) -> (i32, i32) {
    %c0_i32 = arith.constant 0 : i32
    %c0_i32_0 = arith.constant 0 : i32
    %c0_i32_1 = arith.constant 0 : i32
    return %c0_i32, %c0_i32_0 : i32, i32
  }
  func.func @transform_4(%arg0: i32) -> (i32, i32) {
    %c0_i32 = arith.constant 0 : i32
    %c0_i32_0 = arith.constant 0 : i32
    %c0_i32_1 = arith.constant 0 : i32
    return %c0_i32, %c0_i32_0 : i32, i32
  }
  func.func @transform_5(%arg0: i32) -> (i32, i32) {
    %c0_i32 = arith.constant 0 : i32
    %c0_i32_0 = arith.constant 0 : i32
    %c0_i32_1 = arith.constant 0 : i32
    return %c0_i32, %c0_i32_0 : i32, i32
  }
  func.func @transform_6(%arg0: i32) -> (i32, i32) {
    %c0_i32 = arith.constant 0 : i32
    %c0_i32_0 = arith.constant 0 : i32
    %c0_i32_1 = arith.constant 0 : i32
    return %c0_i32, %c0_i32_0 : i32, i32
  }
  func.func @transform_7(%arg0: i32) -> (i32, i32) {
    %c0_i32 = arith.constant 0 : i32
    %c0_i32_0 = arith.constant 0 : i32
    %c0_i32_1 = arith.constant 0 : i32
    return %c0_i32, %c0_i32_0 : i32, i32
  }
  func.func @transform_8(%arg0: i32) -> (i32, i32) {
    %c0_i32 = arith.constant 0 : i32
    %c0_i32_0 = arith.constant 0 : i32
    %c0_i32_1 = arith.constant 0 : i32
    return %c0_i32, %c0_i32_0 : i32, i32
  }
  func.func @transform_9(%arg0: i32) -> (i32, i32) {
    %c0_i32 = arith.constant 0 : i32
    %c0_i32_0 = arith.constant 0 : i32
    %c0_i32_1 = arith.constant 0 : i32
    return %c0_i32, %c0_i32_0 : i32, i32
  }
  func.func @transform_10(%arg0: i32) -> (i32, i32) {
    %c0_i32 = arith.constant 0 : i32
    %c0_i32_0 = arith.constant 0 : i32
    %c0_i32_1 = arith.constant 0 : i32
    return %c0_i32, %c0_i32_0 : i32, i32
  }
  func.func @transform_11(%arg0: i32) -> (i32, i32) {
    %c0_i32 = arith.constant 0 : i32
    %c0_i32_0 = arith.constant 0 : i32
    %c0_i32_1 = arith.constant 0 : i32
    return %c0_i32, %c0_i32_0 : i32, i32
  }
  func.func @transform_12(%arg0: i32) -> (i32, i32) {
    %c0_i32 = arith.constant 0 : i32
    %c0_i32_0 = arith.constant 0 : i32
    return %arg0, %c0_i32 : i32, i32
  }
}

</mosaic_0001>

<llo_original>
// kernel: tpu_custom_call.1
$region0: #{tpu_custom_call.1}
  #allocation0 [shape = 'u32[]', space=smem, size = 0x4, offset = 0x4, fixed_abs, tag = 'smem constant byte address 0x4 - core index']
  #allocation1 [shape = 'u32[144,128]{1,0:T(1,128)}', space=vmem, size = 0x12000, scoped, tag = 'internal scratch']
  %s0 = inlined_call_operand.vmem [shape: f32[16,64], index: 0, kind: input, shape index: {}]
  %s1 = inlined_call_operand.vmem [shape: f32[64,32], index: 1, kind: input, shape index: {}]
  %s2 = inlined_call_operand.vmem [shape: f32[1,32], index: 2, kind: input, shape index: {}]
  %s3 = inlined_call_operand.vmem [shape: f32[32,256], index: 3, kind: input, shape index: {}]
  %s4 = inlined_call_operand.vmem [shape: f32[1,256], index: 4, kind: input, shape index: {}]
  %s5 = inlined_call_operand.hbm [shape: f32[256,256], index: 5, kind: input, shape index: {}]
  %s6 = inlined_call_operand.vmem [shape: f32[1,256], index: 6, kind: input, shape index: {}]
  %s7 = inlined_call_operand.vmem [shape: f32[256,32], index: 7, kind: input, shape index: {}]
  %s8 = inlined_call_operand.vmem [shape: f32[32,128], index: 8, kind: input, shape index: {}]
  %s9 = inlined_call_operand.vmem [shape: f32[1,128], index: 9, kind: input, shape index: {}]
  %s10 = inlined_call_operand.vmem [shape: f32[128,128], index: 10, kind: input, shape index: {}]
  %s11 = inlined_call_operand.vmem [shape: f32[1,128], index: 11, kind: input, shape index: {}]
  %s12 = inlined_call_operand.hbm [shape: f32[16,128], index: 12, kind: output, shape index: {}]
  %s13 = sld [smem:[#allocation0]]
  $region85: #{tpu_custom_call.1} parent=0
    _
  %s15 = ssub.s32 1, %s13
  %s16 = scalar_select 0, %s15, %s13
  $region1: #{tpu_custom_call.1} parent=0
    #allocation2 [shape = 'u8[262144]{0}', space=vmem, size = 0x40000, scoped, tag = 'input window, operand 5, single buffered']
    #allocation3 [shape = 's32[2]{0}', space=sflag, size = 0x8, scoped, tag = 'scoped memory for tpu_custom_call.1']
    #allocation4 [shape = 's32[2]{0}', space=sflag, size = 0x8, scoped, tag = 'scoped memory for tpu_custom_call.1']
    #allocation5 [shape = 'u8[8192]{0}', space=vmem, size = 0x2000, scoped, tag = 'output window, operand 0']
    %17 = vsyncpa [#allocation3], 0
    %18 = vsyncpa [#allocation4], 0
    %s19 = scalar_lea.sflag [#allocation4], 1
    %20 = vsyncpa %s19, 0
    loop: start=0, step=1, limit=4
    $region2: #{tpu_custom_call.1} parent=1 // loop_pre_header
      _
    $region3: #{tpu_custom_call.1} parent=1 // loop_header
      %s22 = sphi 0, %s26
      %p23 = scmp.ge.s32.totalorder %s22, 4
      %s32 = sphi 0, %s34
      %s35 = sphi 0, %s32
      %s36 = sphi 0, %s35
      %s52 = sphi 0, %s36
      %s56 = sphi 0, %s56
      %s58 = sphi 0, %s56
      %s59 = sphi 0, %s58
      %s73 = sphi 0, %s59
      %s77 = sphi 0, %s77
      %s79 = sphi 0, %s77
      %s80 = sphi 0, %s79
      %s94 = sphi 0, %s80
      %s98 = sphi 0, %s98
      %s100 = sphi 0, %s98
      %s101 = sphi 0, %s100
      %s115 = sphi 0, %s101
      %s119 = sphi 0, %s119
      %s121 = sphi 0, %s119
      %s122 = sphi 0, %s121
      %s136 = sphi 0, %s122
      %s140 = sphi 0, %s140
      %s142 = sphi 0, %s140
      %s143 = sphi 0, %s142
      %s157 = sphi 0, %s143
      %s161 = sphi 0, %s161
      %s163 = sphi 0, %s161
      %s164 = sphi 0, %s163
      %s178 = sphi 0, %s164
      %s182 = sphi 0, %s182
      %s184 = sphi 0, %s182
      %s185 = sphi 0, %s184
      %s199 = sphi 0, %s185
      %s203 = sphi 0, %s203
      %s205 = sphi 0, %s203
      %s206 = sphi 0, %s205
      %s220 = sphi 0, %s206
      %s224 = sphi 0, %s224
      %s226 = sphi 0, %s224
      %s227 = sphi 0, %s226
      %s241 = sphi 0, %s227
      %s245 = sphi 0, %s245
      %s247 = sphi 0, %s245
      %s248 = sphi 0, %s247
      %s262 = sphi 0, %s248
      %s266 = sphi 0, %s266
      %s268 = sphi 0, %s266
      %s269 = sphi 0, %s268
      %s283 = sphi 0, %s269
      %s289 = sphi 0, %s291
      %s292 = sphi 0, %s289
      %s293 = sphi 0, %s292
      %s309 = sphi 0, %s293
    $region4: #{tpu_custom_call.1} parent=1 // loop_header_branch
      %25 = sbr.rel (%p23) target = $region8
    $region5: #{tpu_custom_call.1} parent=1 // loop_body
      %s27 = ssub.s32 %s22, 1
      %s28 = ssub.s32 %s22, 2
      %s29 = sadd.s32 %s22, 1
      %s30 = ssub.s32 %s22, %s29
      %p31 = scmp.eq.s32.totalorder %s30, 0
      %s33 = sadd.s32 %s32, 1
      %s34 = scalar_select %p31, %s32, %s33
      %p37 = pneg %p31
      %p38 = scmp.eq.s32.totalorder %s22, 1
      %p39 = por %p37, %p38
      %p40 = scmp.ne.s32.totalorder %s32, %s35
      %p41 = scmp.eq.s32.totalorder %s22, 0
      %p42 = por %p40, %p41
      %p43 = scmp.ne.s32.totalorder %s32, %s35
      %p44 = scmp.eq.s32.totalorder %s27, 1
      %p45 = por %p43, %p44
      %p46 = scmp.ne.s32.totalorder %s35, %s36
      %p47 = scmp.eq.s32.totalorder %s27, 0
      %p48 = por %p46, %p47
      %p49 = scmp.ne.s32.totalorder %s35, %s36
      %p50 = scmp.eq.s32.totalorder %s28, 1
      %p51 = por %p49, %p50
      %p53 = scmp.ne.s32.totalorder %s36, %s52
      %p54 = scmp.eq.s32.totalorder %s28, 0
      %p55 = por %p53, %p54
      %s57 = sadd.s32 %s56, 1
      %p60 = scmp.eq.s32.totalorder %s22, 1
      %p61 = scmp.ne.s32.totalorder %s56, %s58
      %p62 = scmp.eq.s32.totalorder %s22, 0
      %p63 = por %p61, %p62
      %p64 = scmp.ne.s32.totalorder %s56, %s58
      %p65 = scmp.eq.s32.totalorder %s27, 1
      %p66 = por %p64, %p65
      %p67 = scmp.ne.s32.totalorder %s58, %s59
      %p68 = scmp.eq.s32.totalorder %s27, 0
      %p69 = por %p67, %p68
      %p70 = scmp.ne.s32.totalorder %s58, %s59
      %p71 = scmp.eq.s32.totalorder %s28, 1
      %p72 = por %p70, %p71
      %p74 = scmp.ne.s32.totalorder %s59, %s73
      %p75 = scmp.eq.s32.totalorder %s28, 0
      %p76 = por %p74, %p75
      %s78 = sadd.s32 %s77, 1
      %p81 = scmp.eq.s32.totalorder %s22, 1
      %p82 = scmp.ne.s32.totalorder %s77, %s79
      %p83 = scmp.eq.s32.totalorder %s22, 0
      %p84 = por %p82, %p83
      %p85 = scmp.ne.s32.totalorder %s77, %s79
      %p86 = scmp.eq.s32.totalorder %s27, 1
      %p87 = por %p85, %p86
      %p88 = scmp.ne.s32.totalorder %s79, %s80
      %p89 = scmp.eq.s32.totalorder %s27, 0
      %p90 = por %p88, %p89
      %p91 = scmp.ne.s32.totalorder %s79, %s80
      %p92 = scmp.eq.s32.totalorder %s28, 1
      %p93 = por %p91, %p92
      %p95 = scmp.ne.s32.totalorder %s80, %s94
      %p96 = scmp.eq.s32.totalorder %s28, 0
      %p97 = por %p95, %p96
      %s99 = sadd.s32 %s98, 1
      %p102 = scmp.eq.s32.totalorder %s22, 1
      %p103 = scmp.ne.s32.totalorder %s98, %s100
      %p104 = scmp.eq.s32.totalorder %s22, 0
      %p105 = por %p103, %p104
      %p106 = scmp.ne.s32.totalorder %s98, %s100
      %p107 = scmp.eq.s32.totalorder %s27, 1
      %p108 = por %p106, %p107
      %p109 = scmp.ne.s32.totalorder %s100, %s101
      %p110 = scmp.eq.s32.totalorder %s27, 0
      %p111 = por %p109, %p110
      %p112 = scmp.ne.s32.totalorder %s100, %s101
      %p113 = scmp.eq.s32.totalorder %s28, 1
      %p114 = por %p112, %p113
      %p116 = scmp.ne.s32.totalorder %s101, %s115
      %p117 = scmp.eq.s32.totalorder %s28, 0
      %p118 = por %p116, %p117
      %s120 = sadd.s32 %s119, 1
      %p123 = scmp.eq.s32.totalorder %s22, 1
      %p124 = scmp.ne.s32.totalorder %s119, %s121
      %p125 = scmp.eq.s32.totalorder %s22, 0
      %p126 = por %p124, %p125
      %p127 = scmp.ne.s32.totalorder %s119, %s121
      %p128 = scmp.eq.s32.totalorder %s27, 1
      %p129 = por %p127, %p128
      %p130 = scmp.ne.s32.totalorder %s121, %s122
      %p131 = scmp.eq.s32.totalorder %s27, 0
      %p132 = por %p130, %p131
      %p133 = scmp.ne.s32.totalorder %s121, %s122
      %p134 = scmp.eq.s32.totalorder %s28, 1
      %p135 = por %p133, %p134
      %p137 = scmp.ne.s32.totalorder %s122, %s136
      %p138 = scmp.eq.s32.totalorder %s28, 0
      %p139 = por %p137, %p138
      %s141 = sadd.s32 %s140, 1
      %p144 = scmp.eq.s32.totalorder %s22, 1
      %p145 = scmp.ne.s32.totalorder %s140, %s142
      %p146 = scmp.eq.s32.totalorder %s22, 0
      %p147 = por %p145, %p146
      %p148 = scmp.ne.s32.totalorder %s140, %s142
      %p149 = scmp.eq.s32.totalorder %s27, 1
      %p150 = por %p148, %p149
      %p151 = scmp.ne.s32.totalorder %s142, %s143
      %p152 = scmp.eq.s32.totalorder %s27, 0
      %p153 = por %p151, %p152
      %p154 = scmp.ne.s32.totalorder %s142, %s143
      %p155 = scmp.eq.s32.totalorder %s28, 1
      %p156 = por %p154, %p155
      %p158 = scmp.ne.s32.totalorder %s143, %s157
      %p159 = scmp.eq.s32.totalorder %s28, 0
      %p160 = por %p158, %p159
      %s162 = sadd.s32 %s161, 1
      %p165 = scmp.eq.s32.totalorder %s22, 1
      %p166 = scmp.ne.s32.totalorder %s161, %s163
      %p167 = scmp.eq.s32.totalorder %s22, 0
      %p168 = por %p166, %p167
      %p169 = scmp.ne.s32.totalorder %s161, %s163
      %p170 = scmp.eq.s32.totalorder %s27, 1
      %p171 = por %p169, %p170
      %p172 = scmp.ne.s32.totalorder %s163, %s164
      %p173 = scmp.eq.s32.totalorder %s27, 0
      %p174 = por %p172, %p173
      %p175 = scmp.ne.s32.totalorder %s163, %s164
      %p176 = scmp.eq.s32.totalorder %s28, 1
      %p177 = por %p175, %p176
      %p179 = scmp.ne.s32.totalorder %s164, %s178
      %p180 = scmp.eq.s32.totalorder %s28, 0
      %p181 = por %p179, %p180
      %s183 = sadd.s32 %s182, 1
      %p186 = scmp.eq.s32.totalorder %s22, 1
      %p187 = scmp.ne.s32.totalorder %s182, %s184
      %p188 = scmp.eq.s32.totalorder %s22, 0
      %p189 = por %p187, %p188
      %p190 = scmp.ne.s32.totalorder %s182, %s184
      %p191 = scmp.eq.s32.totalorder %s27, 1
      %p192 = por %p190, %p191
      %p193 = scmp.ne.s32.totalorder %s184, %s185
      %p194 = scmp.eq.s32.totalorder %s27, 0
      %p195 = por %p193, %p194
      %p196 = scmp.ne.s32.totalorder %s184, %s185
      %p197 = scmp.eq.s32.totalorder %s28, 1
      %p198 = por %p196, %p197
      %p200 = scmp.ne.s32.totalorder %s185, %s199
      %p201 = scmp.eq.s32.totalorder %s28, 0
      %p202 = por %p200, %p201
      %s204 = sadd.s32 %s203, 1
      %p207 = scmp.eq.s32.totalorder %s22, 1
      %p208 = scmp.ne.s32.totalorder %s203, %s205
      %p209 = scmp.eq.s32.totalorder %s22, 0
      %p210 = por %p208, %p209
      %p211 = scmp.ne.s32.totalorder %s203, %s205
      %p212 = scmp.eq.s32.totalorder %s27, 1
      %p213 = por %p211, %p212
      %p214 = scmp.ne.s32.totalorder %s205, %s206
      %p215 = scmp.eq.s32.totalorder %s27, 0
      %p216 = por %p214, %p215
      %p217 = scmp.ne.s32.totalorder %s205, %s206
      %p218 = scmp.eq.s32.totalorder %s28, 1
      %p219 = por %p217, %p218
      %p221 = scmp.ne.s32.totalorder %s206, %s220
      %p222 = scmp.eq.s32.totalorder %s28, 0
      %p223 = por %p221, %p222
      %s225 = sadd.s32 %s224, 1
      %p228 = scmp.eq.s32.totalorder %s22, 1
      %p229 = scmp.ne.s32.totalorder %s224, %s226
      %p230 = scmp.eq.s32.totalorder %s22, 0
      %p231 = por %p229, %p230
      %p232 = scmp.ne.s32.totalorder %s224, %s226
      %p233 = scmp.eq.s32.totalorder %s27, 1
      %p234 = por %p232, %p233
      %p235 = scmp.ne.s32.totalorder %s226, %s227
      %p236 = scmp.eq.s32.totalorder %s27, 0
      %p237 = por %p235, %p236
      %p238 = scmp.ne.s32.totalorder %s226, %s227
      %p239 = scmp.eq.s32.totalorder %s28, 1
      %p240 = por %p238, %p239
      %p242 = scmp.ne.s32.totalorder %s227, %s241
      %p243 = scmp.eq.s32.totalorder %s28, 0
      %p244 = por %p242, %p243
      %s246 = sadd.s32 %s245, 1
      %p249 = scmp.eq.s32.totalorder %s22, 1
      %p250 = scmp.ne.s32.totalorder %s245, %s247
      %p251 = scmp.eq.s32.totalorder %s22, 0
      %p252 = por %p250, %p251
      %p253 = scmp.ne.s32.totalorder %s245, %s247
      %p254 = scmp.eq.s32.totalorder %s27, 1
      %p255 = por %p253, %p254
      %p256 = scmp.ne.s32.totalorder %s247, %s248
      %p257 = scmp.eq.s32.totalorder %s27, 0
      %p258 = por %p256, %p257
      %p259 = scmp.ne.s32.totalorder %s247, %s248
      %p260 = scmp.eq.s32.totalorder %s28, 1
      %p261 = por %p259, %p260
      %p263 = scmp.ne.s32.totalorder %s248, %s262
      %p264 = scmp.eq.s32.totalorder %s28, 0
      %p265 = por %p263, %p264
      %s267 = sadd.s32 %s266, 1
      %p270 = scmp.eq.s32.totalorder %s22, 1
      %p271 = scmp.ne.s32.totalorder %s266, %s268
      %p272 = scmp.eq.s32.totalorder %s22, 0
      %p273 = por %p271, %p272
      %p274 = scmp.ne.s32.totalorder %s266, %s268
      %p275 = scmp.eq.s32.totalorder %s27, 1
      %p276 = por %p274, %p275
      %p277 = scmp.ne.s32.totalorder %s268, %s269
      %p278 = scmp.eq.s32.totalorder %s27, 0
      %p279 = por %p277, %p278
      %p280 = scmp.ne.s32.totalorder %s268, %s269
      %p281 = scmp.eq.s32.totalorder %s28, 1
      %p282 = por %p280, %p281
      %p284 = scmp.ne.s32.totalorder %s269, %s283
      %p285 = scmp.eq.s32.totalorder %s28, 0
      %p286 = por %p284, %p285
      %s287 = ssub.s32 %s22, %s29
      %p288 = scmp.eq.s32.totalorder %s287, 0
      %s290 = sadd.s32 %s289, 1
      %s291 = scalar_select %p288, %s289, %s290
      %p294 = pneg %p288
      %p295 = scmp.eq.s32.totalorder %s22, 1
      %p296 = por %p294, %p295
      %p297 = scmp.ne.s32.totalorder %s289, %s292
      %p298 = scmp.eq.s32.totalorder %s22, 0
      %p299 = por %p297, %p298
      %p300 = scmp.ne.s32.totalorder %s289, %s292
      %p301 = scmp.eq.s32.totalorder %s27, 1
      %p302 = por %p300, %p301
      %p303 = scmp.ne.s32.totalorder %s292, %s293
      %p304 = scmp.eq.s32.totalorder %s27, 0
      %p305 = por %p303, %p304
      %p306 = scmp.ne.s32.totalorder %s292, %s293
      %p307 = scmp.eq.s32.totalorder %s28, 1
      %p308 = por %p306, %p307
      %p310 = scmp.ne.s32.totalorder %s293, %s309
      %p311 = scmp.eq.s32.totalorder %s28, 0
      %p312 = por %p310, %p311
      %p313 = scmp.le.s32.totalorder 1, %s22
      %p314 = scmp.lt.s32.totalorder %s22, 3
      %p315 = pnand %p313, %p314
      %p316 = pneg %p315
      // Predicated region
      $region9: #{tpu_custom_call.1} parent=5 // pred_check
        _
      $region10: #{tpu_custom_call.1} parent=5 // pred_check_branch
        %318 = sbr.rel (%p315) target = $region12
      $region11: #{tpu_custom_call.1} parent=5 // pred_region
        %s319 = ssub.s32 %s22, 1
        // Predicated region
        $region13: #{tpu_custom_call.1} parent=11 // pred_check
          %p320 = pneg %p69
        $region14: #{tpu_custom_call.1} parent=11 // pred_check_branch
          %322 = sbr.rel (%p320) target = $region16
        $region15: #{tpu_custom_call.1} parent=11 // pred_region
          _
        $region16: #{tpu_custom_call.1} parent=11 // pred_fallthru
          _
        // Predicated region
        $region17: #{tpu_custom_call.1} parent=11 // pred_check
          %p323 = pneg %p90
        $region18: #{tpu_custom_call.1} parent=11 // pred_check_branch
          %325 = sbr.rel (%p323) target = $region20
        $region19: #{tpu_custom_call.1} parent=11 // pred_region
          _
        $region20: #{tpu_custom_call.1} parent=11 // pred_fallthru
          _
        // Predicated region
        $region21: #{tpu_custom_call.1} parent=11 // pred_check
          %p326 = pneg %p111
        $region22: #{tpu_custom_call.1} parent=11 // pred_check_branch
          %328 = sbr.rel (%p326) target = $region24
        $region23: #{tpu_custom_call.1} parent=11 // pred_region
          _
        $region24: #{tpu_custom_call.1} parent=11 // pred_fallthru
          _
        // Predicated region
        $region25: #{tpu_custom_call.1} parent=11 // pred_check
          %p329 = pneg %p132
        $region26: #{tpu_custom_call.1} parent=11 // pred_check_branch
          %331 = sbr.rel (%p329) target = $region28
        $region27: #{tpu_custom_call.1} parent=11 // pred_region
          _
        $region28: #{tpu_custom_call.1} parent=11 // pred_fallthru
          _
        // Predicated region
        $region29: #{tpu_custom_call.1} parent=11 // pred_check
          %p332 = pneg %p153
        $region30: #{tpu_custom_call.1} parent=11 // pred_check_branch
          %334 = sbr.rel (%p332) target = $region32
        $region31: #{tpu_custom_call.1} parent=11 // pred_region
          %s336 = ssub.s32 8192, 8192
          %337 = vsyncadd [#allocation3], %s336
          %s338 = sshll.u32 [#allocation2], 4
          %s339 = int_to_ptr.vmem [resolvable:$true] %s338
          %344 = dma.hbm_to_vmem [thread:$0]  %s5, 8192, %s339, [#allocation3], 256, 256, 16
        $region32: #{tpu_custom_call.1} parent=11 // pred_fallthru
          _
        // Predicated region
        $region33: #{tpu_custom_call.1} parent=11 // pred_check
          %p345 = pneg %p174
        $region34: #{tpu_custom_call.1} parent=11 // pred_check_branch
          %347 = sbr.rel (%p345) target = $region36
        $region35: #{tpu_custom_call.1} parent=11 // pred_region
          _
        $region36: #{tpu_custom_call.1} parent=11 // pred_fallthru
          _
        // Predicated region
        $region37: #{tpu_custom_call.1} parent=11 // pred_check
          %p348 = pneg %p195
        $region38: #{tpu_custom_call.1} parent=11 // pred_check_branch
          %350 = sbr.rel (%p348) target = $region40
        $region39: #{tpu_custom_call.1} parent=11 // pred_region
          _
        $region40: #{tpu_custom_call.1} parent=11 // pred_fallthru
          _
        // Predicated region
        $region41: #{tpu_custom_call.1} parent=11 // pred_check
          %p351 = pneg %p216
        $region42: #{tpu_custom_call.1} parent=11 // pred_check_branch
          %353 = sbr.rel (%p351) target = $region44
        $region43: #{tpu_custom_call.1} parent=11 // pred_region
          _
        $region44: #{tpu_custom_call.1} parent=11 // pred_fallthru
          _
        // Predicated region
        $region45: #{tpu_custom_call.1} parent=11 // pred_check
          %p354 = pneg %p237
        $region46: #{tpu_custom_call.1} parent=11 // pred_check_branch
          %356 = sbr.rel (%p354) target = $region48
        $region47: #{tpu_custom_call.1} parent=11 // pred_region
          _
        $region48: #{tpu_custom_call.1} parent=11 // pred_fallthru
          _
        // Predicated region
        $region49: #{tpu_custom_call.1} parent=11 // pred_check
          %p357 = pneg %p258
        $region50: #{tpu_custom_call.1} parent=11 // pred_check_branch
          %359 = sbr.rel (%p357) target = $region52
        $region51: #{tpu_custom_call.1} parent=11 // pred_region
          _
        $region52: #{tpu_custom_call.1} parent=11 // pred_fallthru
          _
        // Predicated region
        $region53: #{tpu_custom_call.1} parent=11 // pred_check
          %p360 = pneg %p279
        $region54: #{tpu_custom_call.1} parent=11 // pred_check_branch
          %362 = sbr.rel (%p360) target = $region56
        $region55: #{tpu_custom_call.1} parent=11 // pred_region
          _
        $region56: #{tpu_custom_call.1} parent=11 // pred_fallthru
          _
      $region12: #{tpu_custom_call.1} parent=5 // pred_fallthru
        _
      %p363 = scmp.lt.s32.totalorder %s22, 2
      // Predicated region
      $region57: #{tpu_custom_call.1} parent=5 // pred_check
        %p364 = pneg %p363
      $region58: #{tpu_custom_call.1} parent=5 // pred_check_branch
        %366 = sbr.rel (%p364) target = $region60
      $region59: #{tpu_custom_call.1} parent=5 // pred_region
        // Predicated region
        $region61: #{tpu_custom_call.1} parent=59 // pred_check
          %p367 = pneg %p42
        $region62: #{tpu_custom_call.1} parent=59 // pred_check_branch
          %369 = sbr.rel (%p367) target = $region64
        $region63: #{tpu_custom_call.1} parent=59 // pred_region
          %p370 = scmp.lt.s32.totalorder %s22, 1
          %s371 = scalar_select %p370, %s22, 1
          %s372 = smul.addr %s371, 8
          %s373 = scalar_lea.vmem %s0, %s372
        $region64: #{tpu_custom_call.1} parent=59 // pred_fallthru
          _
      $region60: #{tpu_custom_call.1} parent=5 // pred_fallthru
        _
      %p374 = scmp.le.s32.totalorder 1, %s22
      %p375 = scmp.lt.s32.totalorder %s22, 3
      %p376 = pnand %p374, %p375
      %p377 = pneg %p376
      // Predicated region
      $region65: #{tpu_custom_call.1} parent=5 // pred_check
        _
      $region66: #{tpu_custom_call.1} parent=5 // pred_check_branch
        %379 = sbr.rel (%p376) target = $region68
      $region67: #{tpu_custom_call.1} parent=5 // pred_region
        %s380 = ssub.s32 %s22, 1
        // Predicated region
        $region69: #{tpu_custom_call.1} parent=67 // pred_check
          %p381 = pneg %p153
        $region70: #{tpu_custom_call.1} parent=67 // pred_check_branch
          %383 = sbr.rel (%p381) target = $region72
        $region71: #{tpu_custom_call.1} parent=67 // pred_region
          %384 = dma.done [#allocation3], 8192
        $region72: #{tpu_custom_call.1} parent=67 // pred_fallthru
          _
        %p385 = scmp.lt.s32.totalorder %s27, 1
        %s386 = scalar_select %p385, %s27, 1
        %s387 = smul.addr %s386, 8
        %s388 = scalar_lea.vmem %s0, %s387
        %p389 = pneg %p48
        %p390 = pneg %p45
        %p391 = pneg %p69
        %p392 = pneg %p66
        %p393 = pneg %p90
        %p394 = pneg %p87
        %p395 = pneg %p111
        %p396 = pneg %p108
        %p397 = pneg %p132
        %p398 = pneg %p129
        %p399 = pneg %p153
        %p400 = pneg %p150
        %p401 = pneg %p174
        %p402 = pneg %p171
        %p403 = pneg %p195
        %p404 = pneg %p192
        %p405 = pneg %p216
        %p406 = pneg %p213
        %p407 = pneg %p237
        %p408 = pneg %p234
        %p409 = pneg %p258
        %p410 = pneg %p255
        %p411 = pneg %p279
        %p412 = pneg %p276
        %p413 = pneg %p305
        %p414 = pneg %p302
        %s415 = sand.u32 %s292, 1
        %s416 = scalar_lea.sflag [#allocation4], %s415
        %s417 = sand.u32 %s292, 1
        %s418 = smul.addr %s417, 8
        %s419 = scalar_lea.vmem [#allocation5], %s418
        %p420 = scmp.lt.s32.totalorder %s27, 1
        %s421 = scalar_select %p420, %s27, 1
        %s422 = smul.addr %s421, 8
        %s423 = scalar_lea.vmem %s0, %s422
        %v424 = vld [vmem:[%s423] sm:$0xff]
        %v425 = vld [vmem:[%s1] sm:$0xff]
        %v426 = vld [vmem:[%s1 + $0x8] sm:$0xff]
        %v427 = vld [vmem:[%s1 + $0x10] sm:$0xff]
        %v428 = vld [vmem:[%s1 + $0x18] sm:$0xff]
        %v429 = vld [vmem:[%s1 + $0x20] sm:$0xff]
        %v430 = vld [vmem:[%s1 + $0x28] sm:$0xff]
        %v431 = vld [vmem:[%s1 + $0x30] sm:$0xff]
        %v432 = vld [vmem:[%s1 + $0x38] sm:$0xff]
        %v433 = vld [vmem:[%s2] sm:$0x1]
        %v435 = vlaneseq
        %v436 = vshrl.u32 %v435, 7
        %v437 = vsub.s32 0, %v436
        %v438 = vrot.slane %v433, %v437
        %vm440 = vcmask 523264
        %v442 = vsel %vm440, %v424, 0
        %444 = vmatprep.subr.mxu0 0.0
        %445 = vmatpush1.msra.mxu0 0.0
        %446 = vmatprep.subr.mxu0 0.0
        %447 = vmatpush1.msra.mxu0 0.0
        %448 = vmatprep.subr.mxu0 0.0
        %449 = vmatpush1.msra.mxu0 0.0
        %450 = vmatprep.subr.mxu0 0.0
        %451 = vmatpush1.msra.mxu0 0.0
        %452 = vmatprep.subr.mxu0 0.0
        %453 = vmatpush1.msra.mxu0 0.0
        %454 = vmatprep.subr.mxu0 0.0
        %455 = vmatpush1.msra.mxu0 0.0
        %456 = vmatprep.subr.mxu0 0.0
        %457 = vmatpush1.msra.mxu0 0.0
        %458 = vmatprep.subr.mxu0 0.0
        %459 = vmatpush1.msra.mxu0 0.0
        %460 = vmatprep.subr.mxu0 0.0
        %461 = vmatpush1.msra.mxu0 %v432
        %462 = vmatprep.subr.mxu0 0.0
        %463 = vmatpush1.msra.mxu0 %v431
        %464 = vmatprep.subr.mxu0 0.0
        %465 = vmatpush1.msra.mxu0 %v430
        %466 = vmatprep.subr.mxu0 0.0
        %467 = vmatpush1.msra.mxu0 %v429
        %468 = vmatprep.subr.mxu0 0.0
        %469 = vmatpush1.msra.mxu0 %v428
        %470 = vmatprep.subr.mxu0 0.0
        %471 = vmatpush1.msra.mxu0 %v427
        %472 = vmatprep.subr.mxu0 0.0
        %473 = vmatpush1.msra.mxu0 %v426
        %474 = vmatprep.subr.mxu0 0.0
        %475 = vmatpush1.msra.mxu0 %v425
        %476 = vmatprep.subr.mxu0 0.0
        %477 = vmatpush2.msra.mxu0 0.0
        %478 = vmatprep.subr.mxu0 0.0
        %479 = vmatpush2.msra.mxu0 0.0
        %480 = vmatprep.subr.mxu0 0.0
        %481 = vmatpush2.msra.mxu0 0.0
        %482 = vmatprep.subr.mxu0 0.0
        %483 = vmatpush2.msra.mxu0 0.0
        %484 = vmatprep.subr.mxu0 0.0
        %485 = vmatpush2.msra.mxu0 0.0
        %486 = vmatprep.subr.mxu0 0.0
        %487 = vmatpush2.msra.mxu0 0.0
        %488 = vmatprep.subr.mxu0 0.0
        %489 = vmatpush2.msra.mxu0 0.0
        %490 = vmatprep.subr.mxu0 0.0
        %491 = vmatpush2.msra.mxu0 0.0
        %492 = vmatprep.subr.mxu0 0.0
        %493 = vmatpush2.msra.mxu0 0.0
        %494 = vmatprep.subr.mxu0 0.0
        %495 = vmatpush2.msra.mxu0 0.0
        %496 = vmatprep.subr.mxu0 0.0
        %497 = vmatpush2.msra.mxu0 0.0
        %498 = vmatprep.subr.mxu0 0.0
        %499 = vmatpush2.msra.mxu0 0.0
        %500 = vmatprep.subr.mxu0 0.0
        %501 = vmatpush2.msra.mxu0 0.0
        %502 = vmatprep.subr.mxu0 0.0
        %503 = vmatpush2.msra.mxu0 0.0
        %504 = vmatprep.subr.mxu0 0.0
        %505 = vmatpush2.msra.mxu0 0.0
        %506 = vmatprep.subr.mxu0 0.0
        %507 = vmatpush2.msra.mxu0 0.0
        %508 = vmatprep.mubr.f32.mxu0 0.0
        %509 = vmatmul.mubr.f32.gmra.mxu0 %v442
        %v510 = vpop.f32.mrf.mxu0
        %v511 = vadd.f32 %v438, %v510
        %v512 = vpop.f32.mrf.mxu0
        %513 = vdwg.mxu0
        %v514 = vmax.f32 %v511, 0.0
        %v515 = vld [vmem:[%s3] sm:$0xff]
        %v516 = vld [vmem:[%s3 + $0x8] sm:$0xff]
        %v517 = vld [vmem:[%s3 + $0x10] sm:$0xff]
        %v518 = vld [vmem:[%s3 + $0x18] sm:$0xff]
        %v519 = vld [vmem:[%s3 + $0x20] sm:$0xff]
        %v520 = vld [vmem:[%s3 + $0x28] sm:$0xff]
        %v521 = vld [vmem:[%s3 + $0x30] sm:$0xff]
        %v522 = vld [vmem:[%s3 + $0x38] sm:$0xff]
        %v523 = vld [vmem:[%s4] sm:$0x3]
        %v525 = vlaneseq
        %v526 = vshrl.u32 %v525, 7
        %v527 = vsub.s32 0, %v526
        %v528 = vrot.slane %v523, %v527
        %v529 = vlaneseq
        %v530 = vshrl.u32 %v529, 7
        %v531 = vsub.s32 1, %v530
        %v532 = vrot.slane %v523, %v531
        %vm535 = vcmask 261120
        %v537 = vsel %vm535, %v514, 0
        %539 = vmatprep.subr.mxu0 0.0
        %540 = vmatpush1.msra.mxu0 0.0
        %541 = vmatprep.subr.mxu0 0.0
        %542 = vmatpush1.msra.mxu0 0.0
        %543 = vmatprep.subr.mxu0 0.0
        %544 = vmatpush1.msra.mxu0 0.0
        %545 = vmatprep.subr.mxu0 0.0
        %546 = vmatpush1.msra.mxu0 0.0
        %547 = vmatprep.subr.mxu0 0.0
        %548 = vmatpush1.msra.mxu0 0.0
        %549 = vmatprep.subr.mxu0 0.0
        %550 = vmatpush1.msra.mxu0 0.0
        %551 = vmatprep.subr.mxu0 0.0
        %552 = vmatpush1.msra.mxu0 0.0
        %553 = vmatprep.subr.mxu0 0.0
        %554 = vmatpush1.msra.mxu0 0.0
        %555 = vmatprep.subr.mxu0 0.0
        %556 = vmatpush1.msra.mxu0 0.0
        %557 = vmatprep.subr.mxu0 0.0
        %558 = vmatpush1.msra.mxu0 0.0
        %559 = vmatprep.subr.mxu0 0.0
        %560 = vmatpush1.msra.mxu0 0.0
        %561 = vmatprep.subr.mxu0 0.0
        %562 = vmatpush1.msra.mxu0 0.0
        %563 = vmatprep.subr.mxu0 %v522
        %564 = vmatpush1.msra.mxu0 %v521
        %565 = vmatprep.subr.mxu0 %v520
        %566 = vmatpush1.msra.mxu0 %v519
        %567 = vmatprep.subr.mxu0 %v518
        %568 = vmatpush1.msra.mxu0 %v517
        %569 = vmatprep.subr.mxu0 %v516
        %570 = vmatpush1.msra.mxu0 %v515
        %571 = vmatprep.subr.mxu0 0.0
        %572 = vmatpush2.msra.mxu0 0.0
        %573 = vmatprep.subr.mxu0 0.0
        %574 = vmatpush2.msra.mxu0 0.0
        %575 = vmatprep.subr.mxu0 0.0
        %576 = vmatpush2.msra.mxu0 0.0
        %577 = vmatprep.subr.mxu0 0.0
        %578 = vmatpush2.msra.mxu0 0.0
        %579 = vmatprep.subr.mxu0 0.0
        %580 = vmatpush2.msra.mxu0 0.0
        %581 = vmatprep.subr.mxu0 0.0
        %582 = vmatpush2.msra.mxu0 0.0
        %583 = vmatprep.subr.mxu0 0.0
        %584 = vmatpush2.msra.mxu0 0.0
        %585 = vmatprep.subr.mxu0 0.0
        %586 = vmatpush2.msra.mxu0 0.0
        %587 = vmatprep.subr.mxu0 0.0
        %588 = vmatpush2.msra.mxu0 0.0
        %589 = vmatprep.subr.mxu0 0.0
        %590 = vmatpush2.msra.mxu0 0.0
        %591 = vmatprep.subr.mxu0 0.0
        %592 = vmatpush2.msra.mxu0 0.0
        %593 = vmatprep.subr.mxu0 0.0
        %594 = vmatpush2.msra.mxu0 0.0
        %595 = vmatprep.subr.mxu0 0.0
        %596 = vmatpush2.msra.mxu0 0.0
        %597 = vmatprep.subr.mxu0 0.0
        %598 = vmatpush2.msra.mxu0 0.0
        %599 = vmatprep.subr.mxu0 0.0
        %600 = vmatpush2.msra.mxu0 0.0
        %601 = vmatprep.subr.mxu0 0.0
        %602 = vmatpush2.msra.mxu0 0.0
        %603 = vmatprep.mubr.f32.mxu0 0.0
        %604 = vmatmul.mubr.f32.gmra.mxu0 %v537
        %v605 = vpop.f32.mrf.mxu0
        %v606 = vadd.f32 %v528, %v605
        %v607 = vpop.f32.mrf.mxu0
        %v608 = vadd.f32 %v532, %v607
        %609 = vdwg.mxu0
        %v610 = vmax.f32 %v606, 0.0
        %v611 = vmax.f32 %v608, 0.0
        %v612 = vld [vmem:[#allocation2] sm:$0xff]
        %v613 = vld [vmem:[#allocation2 + $0x8] sm:$0xff]
        %v614 = vld [vmem:[#allocation2 + $0x10] sm:$0xff]
        %v615 = vld [vmem:[#allocation2 + $0x18] sm:$0xff]
        %v616 = vld [vmem:[#allocation2 + $0x20] sm:$0xff]
        %v617 = vld [vmem:[#allocation2 + $0x28] sm:$0xff]
        %v618 = vld [vmem:[#allocation2 + $0x30] sm:$0xff]
        %v619 = vld [vmem:[#allocation2 + $0x38] sm:$0xff]
        %v620 = vld [vmem:[#allocation2 + $0x40] sm:$0xff]
        %v621 = vld [vmem:[#allocation2 + $0x48] sm:$0xff]
        %v622 = vld [vmem:[#allocation2 + $0x50] sm:$0xff]
        %v623 = vld [vmem:[#allocation2 + $0x58] sm:$0xff]
        %v624 = vld [vmem:[#allocation2 + $0x60] sm:$0xff]
        %v625 = vld [vmem:[#allocation2 + $0x68] sm:$0xff]
        %v626 = vld [vmem:[#allocation2 + $0x70] sm:$0xff]
        %v627 = vld [vmem:[#allocation2 + $0x78] sm:$0xff]
        %v628 = vld [vmem:[#allocation2 + $0x80] sm:$0xff]
        %v629 = vld [vmem:[#allocation2 + $0x88] sm:$0xff]
        %v630 = vld [vmem:[#allocation2 + $0x90] sm:$0xff]
        %v631 = vld [vmem:[#allocation2 + $0x98] sm:$0xff]
        %v632 = vld [vmem:[#allocation2 + $0xa0] sm:$0xff]
        %v633 = vld [vmem:[#allocation2 + $0xa8] sm:$0xff]
        %v634 = vld [vmem:[#allocation2 + $0xb0] sm:$0xff]
        %v635 = vld [vmem:[#allocation2 + $0xb8] sm:$0xff]
        %v636 = vld [vmem:[#allocation2 + $0xc0] sm:$0xff]
        %v637 = vld [vmem:[#allocation2 + $0xc8] sm:$0xff]
        %v638 = vld [vmem:[#allocation2 + $0xd0] sm:$0xff]
        %v639 = vld [vmem:[#allocation2 + $0xd8] sm:$0xff]
        %v640 = vld [vmem:[#allocation2 + $0xe0] sm:$0xff]
        %v641 = vld [vmem:[#allocation2 + $0xe8] sm:$0xff]
        %v642 = vld [vmem:[#allocation2 + $0xf0] sm:$0xff]
        %v643 = vld [vmem:[#allocation2 + $0xf8] sm:$0xff]
        %v644 = vld [vmem:[#allocation2 + $0x100] sm:$0xff]
        %v645 = vld [vmem:[#allocation2 + $0x108] sm:$0xff]
        %v646 = vld [vmem:[#allocation2 + $0x110] sm:$0xff]
        %v647 = vld [vmem:[#allocation2 + $0x118] sm:$0xff]
        %v648 = vld [vmem:[#allocation2 + $0x120] sm:$0xff]
        %v649 = vld [vmem:[#allocation2 + $0x128] sm:$0xff]
        %v650 = vld [vmem:[#allocation2 + $0x130] sm:$0xff]
        %v651 = vld [vmem:[#allocation2 + $0x138] sm:$0xff]
        %v652 = vld [vmem:[#allocation2 + $0x140] sm:$0xff]
        %v653 = vld [vmem:[#allocation2 + $0x148] sm:$0xff]
        %v654 = vld [vmem:[#allocation2 + $0x150] sm:$0xff]
        %v655 = vld [vmem:[#allocation2 + $0x158] sm:$0xff]
        %v656 = vld [vmem:[#allocation2 + $0x160] sm:$0xff]
        %v657 = vld [vmem:[#allocation2 + $0x168] sm:$0xff]
        %v658 = vld [vmem:[#allocation2 + $0x170] sm:$0xff]
        %v659 = vld [vmem:[#allocation2 + $0x178] sm:$0xff]
        %v660 = vld [vmem:[#allocation2 + $0x180] sm:$0xff]
        %v661 = vld [vmem:[#allocation2 + $0x188] sm:$0xff]
        %v662 = vld [vmem:[#allocation2 + $0x190] sm:$0xff]
        %v663 = vld [vmem:[#allocation2 + $0x198] sm:$0xff]
        %v664 = vld [vmem:[#allocation2 + $0x1a0] sm:$0xff]
        %v665 = vld [vmem:[#allocation2 + $0x1a8] sm:$0xff]
        %v666 = vld [vmem:[#allocation2 + $0x1b0] sm:$0xff]
        %v667 = vld [vmem:[#allocation2 + $0x1b8] sm:$0xff]
        %v668 = vld [vmem:[#allocation2 + $0x1c0] sm:$0xff]
        %v669 = vld [vmem:[#allocation2 + $0x1c8] sm:$0xff]
        %v670 = vld [vmem:[#allocation2 + $0x1d0] sm:$0xff]
        %v671 = vld [vmem:[#allocation2 + $0x1d8] sm:$0xff]
        %v672 = vld [vmem:[#allocation2 + $0x1e0] sm:$0xff]
        %v673 = vld [vmem:[#allocation2 + $0x1e8] sm:$0xff]
        %v674 = vld [vmem:[#allocation2 + $0x1f0] sm:$0xff]
        %v675 = vld [vmem:[#allocation2 + $0x1f8] sm:$0xff]
        %v676 = vld [vmem:[%s6] sm:$0x3]
        %v678 = vlaneseq
        %v679 = vshrl.u32 %v678, 7
        %v680 = vsub.s32 0, %v679
        %v681 = vrot.slane %v676, %v680
        %v682 = vlaneseq
        %v683 = vshrl.u32 %v682, 7
        %v684 = vsub.s32 1, %v683
        %v685 = vrot.slane %v676, %v684
        %688 = vmatprep.subr.mxu0 %v643
        %689 = vmatpush1.msra.mxu0 %v642
        %690 = vmatprep.subr.mxu0 %v641
        %691 = vmatpush1.msra.mxu0 %v640
        %692 = vmatprep.subr.mxu0 %v639
        %693 = vmatpush1.msra.mxu0 %v638
        %694 = vmatprep.subr.mxu0 %v637
        %695 = vmatpush1.msra.mxu0 %v636
        %696 = vmatprep.subr.mxu0 %v635
        %697 = vmatpush1.msra.mxu0 %v634
        %698 = vmatprep.subr.mxu0 %v633
        %699 = vmatpush1.msra.mxu0 %v632
        %700 = vmatprep.subr.mxu0 %v631
        %701 = vmatpush1.msra.mxu0 %v630
        %702 = vmatprep.subr.mxu0 %v629
        %703 = vmatpush1.msra.mxu0 %v628
        %704 = vmatprep.subr.mxu0 %v627
        %705 = vmatpush1.msra.mxu0 %v626
        %706 = vmatprep.subr.mxu0 %v625
        %707 = vmatpush1.msra.mxu0 %v624
        %708 = vmatprep.subr.mxu0 %v623
        %709 = vmatpush1.msra.mxu0 %v622
        %710 = vmatprep.subr.mxu0 %v621
        %711 = vmatpush1.msra.mxu0 %v620
        %712 = vmatprep.subr.mxu0 %v619
        %713 = vmatpush1.msra.mxu0 %v618
        %714 = vmatprep.subr.mxu0 %v617
        %715 = vmatpush1.msra.mxu0 %v616
        %716 = vmatprep.subr.mxu0 %v615
        %717 = vmatpush1.msra.mxu0 %v614
        %718 = vmatprep.subr.mxu0 %v613
        %719 = vmatpush1.msra.mxu0 %v612
        %720 = vmatprep.subr.mxu0 %v675
        %721 = vmatpush2.msra.mxu0 %v674
        %722 = vmatprep.subr.mxu0 %v673
        %723 = vmatpush2.msra.mxu0 %v672
        %724 = vmatprep.subr.mxu0 %v671
        %725 = vmatpush2.msra.mxu0 %v670
        %726 = vmatprep.subr.mxu0 %v669
        %727 = vmatpush2.msra.mxu0 %v668
        %728 = vmatprep.subr.mxu0 %v667
        %729 = vmatpush2.msra.mxu0 %v666
        %730 = vmatprep.subr.mxu0 %v665
        %731 = vmatpush2.msra.mxu0 %v664
        %732 = vmatprep.subr.mxu0 %v663
        %733 = vmatpush2.msra.mxu0 %v662
        %734 = vmatprep.subr.mxu0 %v661
        %735 = vmatpush2.msra.mxu0 %v660
        %736 = vmatprep.subr.mxu0 %v659
        %737 = vmatpush2.msra.mxu0 %v658
        %738 = vmatprep.subr.mxu0 %v657
        %739 = vmatpush2.msra.mxu0 %v656
        %740 = vmatprep.subr.mxu0 %v655
        %741 = vmatpush2.msra.mxu0 %v654
        %742 = vmatprep.subr.mxu0 %v653
        %743 = vmatpush2.msra.mxu0 %v652
        %744 = vmatprep.subr.mxu0 %v651
        %745 = vmatpush2.msra.mxu0 %v650
        %746 = vmatprep.subr.mxu0 %v649
        %747 = vmatpush2.msra.mxu0 %v648
        %748 = vmatprep.subr.mxu0 %v647
        %749 = vmatpush2.msra.mxu0 %v646
        %750 = vmatprep.subr.mxu0 %v645
        %751 = vmatpush2.msra.mxu0 %v644
        %752 = vmatprep.mubr.f32.mxu0 %v611
        %753 = vmatmul.mubr.f32.gmra.mxu0 %v610
        %v754 = vpop.f32.mrf.mxu0
        %v755 = vadd.f32 %v681, %v754
        %v756 = vpop.f32.mrf.mxu0
        %v757 = vadd.f32 %v685, %v756
        %758 = vdwg.mxu0
        %v759 = vmax.f32 %v755, 0.0
        %v760 = vmax.f32 %v757, 0.0
        %v761 = vld [vmem:[%s7] sm:$0xff]
        %v762 = vld [vmem:[%s7 + $0x8] sm:$0xff]
        %v763 = vld [vmem:[%s7 + $0x10] sm:$0xff]
        %v764 = vld [vmem:[%s7 + $0x18] sm:$0xff]
        %v765 = vld [vmem:[%s7 + $0x20] sm:$0xff]
        %v766 = vld [vmem:[%s7 + $0x28] sm:$0xff]
        %v767 = vld [vmem:[%s7 + $0x30] sm:$0xff]
        %v768 = vld [vmem:[%s7 + $0x38] sm:$0xff]
        %v769 = vld [vmem:[%s7 + $0x40] sm:$0xff]
        %v770 = vld [vmem:[%s7 + $0x48] sm:$0xff]
        %v771 = vld [vmem:[%s7 + $0x50] sm:$0xff]
        %v772 = vld [vmem:[%s7 + $0x58] sm:$0xff]
        %v773 = vld [vmem:[%s7 + $0x60] sm:$0xff]
        %v774 = vld [vmem:[%s7 + $0x68] sm:$0xff]
        %v775 = vld [vmem:[%s7 + $0x70] sm:$0xff]
        %v776 = vld [vmem:[%s7 + $0x78] sm:$0xff]
        %v777 = vld [vmem:[%s7 + $0x80] sm:$0xff]
        %v778 = vld [vmem:[%s7 + $0x88] sm:$0xff]
        %v779 = vld [vmem:[%s7 + $0x90] sm:$0xff]
        %v780 = vld [vmem:[%s7 + $0x98] sm:$0xff]
        %v781 = vld [vmem:[%s7 + $0xa0] sm:$0xff]
        %v782 = vld [vmem:[%s7 + $0xa8] sm:$0xff]
        %v783 = vld [vmem:[%s7 + $0xb0] sm:$0xff]
        %v784 = vld [vmem:[%s7 + $0xb8] sm:$0xff]
        %v785 = vld [vmem:[%s7 + $0xc0] sm:$0xff]
        %v786 = vld [vmem:[%s7 + $0xc8] sm:$0xff]
        %v787 = vld [vmem:[%s7 + $0xd0] sm:$0xff]
        %v788 = vld [vmem:[%s7 + $0xd8] sm:$0xff]
        %v789 = vld [vmem:[%s7 + $0xe0] sm:$0xff]
        %v790 = vld [vmem:[%s7 + $0xe8] sm:$0xff]
        %v791 = vld [vmem:[%s7 + $0xf0] sm:$0xff]
        %v792 = vld [vmem:[%s7 + $0xf8] sm:$0xff]
        %793 = vmatprep.subr.mxu0 0.0
        %794 = vmatpush1.msra.mxu0 %v776
        %795 = vmatprep.subr.mxu0 0.0
        %796 = vmatpush1.msra.mxu0 %v775
        %797 = vmatprep.subr.mxu0 0.0
        %798 = vmatpush1.msra.mxu0 %v774
        %799 = vmatprep.subr.mxu0 0.0
        %800 = vmatpush1.msra.mxu0 %v773
        %801 = vmatprep.subr.mxu0 0.0
        %802 = vmatpush1.msra.mxu0 %v772
        %803 = vmatprep.subr.mxu0 0.0
        %804 = vmatpush1.msra.mxu0 %v771
        %805 = vmatprep.subr.mxu0 0.0
        %806 = vmatpush1.msra.mxu0 %v770
        %807 = vmatprep.subr.mxu0 0.0
        %808 = vmatpush1.msra.mxu0 %v769
        %809 = vmatprep.subr.mxu0 0.0
        %810 = vmatpush1.msra.mxu0 %v768
        %811 = vmatprep.subr.mxu0 0.0
        %812 = vmatpush1.msra.mxu0 %v767
        %813 = vmatprep.subr.mxu0 0.0
        %814 = vmatpush1.msra.mxu0 %v766
        %815 = vmatprep.subr.mxu0 0.0
        %816 = vmatpush1.msra.mxu0 %v765
        %817 = vmatprep.subr.mxu0 0.0
        %818 = vmatpush1.msra.mxu0 %v764
        %819 = vmatprep.subr.mxu0 0.0
        %820 = vmatpush1.msra.mxu0 %v763
        %821 = vmatprep.subr.mxu0 0.0
        %822 = vmatpush1.msra.mxu0 %v762
        %823 = vmatprep.subr.mxu0 0.0
        %824 = vmatpush1.msra.mxu0 %v761
        %825 = vmatprep.subr.mxu0 0.0
        %826 = vmatpush2.msra.mxu0 %v792
        %827 = vmatprep.subr.mxu0 0.0
        %828 = vmatpush2.msra.mxu0 %v791
        %829 = vmatprep.subr.mxu0 0.0
        %830 = vmatpush2.msra.mxu0 %v790
        %831 = vmatprep.subr.mxu0 0.0
        %832 = vmatpush2.msra.mxu0 %v789
        %833 = vmatprep.subr.mxu0 0.0
        %834 = vmatpush2.msra.mxu0 %v788
        %835 = vmatprep.subr.mxu0 0.0
        %836 = vmatpush2.msra.mxu0 %v787
        %837 = vmatprep.subr.mxu0 0.0
        %838 = vmatpush2.msra.mxu0 %v786
        %839 = vmatprep.subr.mxu0 0.0
        %840 = vmatpush2.msra.mxu0 %v785
        %841 = vmatprep.subr.mxu0 0.0
        %842 = vmatpush2.msra.mxu0 %v784
        %843 = vmatprep.subr.mxu0 0.0
        %844 = vmatpush2.msra.mxu0 %v783
        %845 = vmatprep.subr.mxu0 0.0
        %846 = vmatpush2.msra.mxu0 %v782
        %847 = vmatprep.subr.mxu0 0.0
        %848 = vmatpush2.msra.mxu0 %v781
        %849 = vmatprep.subr.mxu0 0.0
        %850 = vmatpush2.msra.mxu0 %v780
        %851 = vmatprep.subr.mxu0 0.0
        %852 = vmatpush2.msra.mxu0 %v779
        %853 = vmatprep.subr.mxu0 0.0
        %854 = vmatpush2.msra.mxu0 %v778
        %855 = vmatprep.subr.mxu0 0.0
        %856 = vmatpush2.msra.mxu0 %v777
        %857 = vmatprep.mubr.f32.mxu0 %v760
        %858 = vmatmul.mubr.f32.gmra.mxu0 %v759
        %v859 = vpop.f32.mrf.mxu0
        %v860 = vadd.f32 0.0, %v859
        %v861 = vpop.f32.mrf.mxu0
        %862 = vdwg.mxu0
        %v863 = vmax.f32 %v860, 0.0
        %v864 = vld [vmem:[%s8] sm:$0xff]
        %v865 = vld [vmem:[%s8 + $0x8] sm:$0xff]
        %v866 = vld [vmem:[%s8 + $0x10] sm:$0xff]
        %v867 = vld [vmem:[%s8 + $0x18] sm:$0xff]
        %v868 = vld [vmem:[%s9] sm:$0x1]
        %v870 = vlaneseq
        %v871 = vshrl.u32 %v870, 7
        %v872 = vsub.s32 0, %v871
        %v873 = vrot.slane %v868, %v872
        %v876 = vsel %vm535, %v863, 0
        %878 = vmatprep.subr.mxu0 0.0
        %879 = vmatpush1.msra.mxu0 0.0
        %880 = vmatprep.subr.mxu0 0.0
        %881 = vmatpush1.msra.mxu0 0.0
        %882 = vmatprep.subr.mxu0 0.0
        %883 = vmatpush1.msra.mxu0 0.0
        %884 = vmatprep.subr.mxu0 0.0
        %885 = vmatpush1.msra.mxu0 0.0
        %886 = vmatprep.subr.mxu0 0.0
        %887 = vmatpush1.msra.mxu0 0.0
        %888 = vmatprep.subr.mxu0 0.0
        %889 = vmatpush1.msra.mxu0 0.0
        %890 = vmatprep.subr.mxu0 0.0
        %891 = vmatpush1.msra.mxu0 0.0
        %892 = vmatprep.subr.mxu0 0.0
        %893 = vmatpush1.msra.mxu0 0.0
        %894 = vmatprep.subr.mxu0 0.0
        %895 = vmatpush1.msra.mxu0 0.0
        %896 = vmatprep.subr.mxu0 0.0
        %897 = vmatpush1.msra.mxu0 0.0
        %898 = vmatprep.subr.mxu0 0.0
        %899 = vmatpush1.msra.mxu0 0.0
        %900 = vmatprep.subr.mxu0 0.0
        %901 = vmatpush1.msra.mxu0 0.0
        %902 = vmatprep.subr.mxu0 0.0
        %903 = vmatpush1.msra.mxu0 %v867
        %904 = vmatprep.subr.mxu0 0.0
        %905 = vmatpush1.msra.mxu0 %v866
        %906 = vmatprep.subr.mxu0 0.0
        %907 = vmatpush1.msra.mxu0 %v865
        %908 = vmatprep.subr.mxu0 0.0
        %909 = vmatpush1.msra.mxu0 %v864
        %910 = vmatprep.subr.mxu0 0.0
        %911 = vmatpush2.msra.mxu0 0.0
        %912 = vmatprep.subr.mxu0 0.0
        %913 = vmatpush2.msra.mxu0 0.0
        %914 = vmatprep.subr.mxu0 0.0
        %915 = vmatpush2.msra.mxu0 0.0
        %916 = vmatprep.subr.mxu0 0.0
        %917 = vmatpush2.msra.mxu0 0.0
        %918 = vmatprep.subr.mxu0 0.0
        %919 = vmatpush2.msra.mxu0 0.0
        %920 = vmatprep.subr.mxu0 0.0
        %921 = vmatpush2.msra.mxu0 0.0
        %922 = vmatprep.subr.mxu0 0.0
        %923 = vmatpush2.msra.mxu0 0.0
        %924 = vmatprep.subr.mxu0 0.0
        %925 = vmatpush2.msra.mxu0 0.0
        %926 = vmatprep.subr.mxu0 0.0
        %927 = vmatpush2.msra.mxu0 0.0
        %928 = vmatprep.subr.mxu0 0.0
        %929 = vmatpush2.msra.mxu0 0.0
        %930 = vmatprep.subr.mxu0 0.0
        %931 = vmatpush2.msra.mxu0 0.0
        %932 = vmatprep.subr.mxu0 0.0
        %933 = vmatpush2.msra.mxu0 0.0
        %934 = vmatprep.subr.mxu0 0.0
        %935 = vmatpush2.msra.mxu0 0.0
        %936 = vmatprep.subr.mxu0 0.0
        %937 = vmatpush2.msra.mxu0 0.0
        %938 = vmatprep.subr.mxu0 0.0
        %939 = vmatpush2.msra.mxu0 0.0
        %940 = vmatprep.subr.mxu0 0.0
        %941 = vmatpush2.msra.mxu0 0.0
        %942 = vmatprep.mubr.f32.mxu0 0.0
        %943 = vmatmul.mubr.f32.gmra.mxu0 %v876
        %v944 = vpop.f32.mrf.mxu0
        %v945 = vadd.f32 %v873, %v944
        %v946 = vpop.f32.mrf.mxu0
        %947 = vdwg.mxu0
        %v948 = vmax.f32 %v945, 0.0
        %v949 = vld [vmem:[%s10] sm:$0xff]
        %v950 = vld [vmem:[%s10 + $0x8] sm:$0xff]
        %v951 = vld [vmem:[%s10 + $0x10] sm:$0xff]
        %v952 = vld [vmem:[%s10 + $0x18] sm:$0xff]
        %v953 = vld [vmem:[%s10 + $0x20] sm:$0xff]
        %v954 = vld [vmem:[%s10 + $0x28] sm:$0xff]
        %v955 = vld [vmem:[%s10 + $0x30] sm:$0xff]
        %v956 = vld [vmem:[%s10 + $0x38] sm:$0xff]
        %v957 = vld [vmem:[%s10 + $0x40] sm:$0xff]
        %v958 = vld [vmem:[%s10 + $0x48] sm:$0xff]
        %v959 = vld [vmem:[%s10 + $0x50] sm:$0xff]
        %v960 = vld [vmem:[%s10 + $0x58] sm:$0xff]
        %v961 = vld [vmem:[%s10 + $0x60] sm:$0xff]
        %v962 = vld [vmem:[%s10 + $0x68] sm:$0xff]
        %v963 = vld [vmem:[%s10 + $0x70] sm:$0xff]
        %v964 = vld [vmem:[%s10 + $0x78] sm:$0xff]
        %v965 = vld [vmem:[%s11] sm:$0x1]
        %v967 = vlaneseq
        %v968 = vshrl.u32 %v967, 7
        %v969 = vsub.s32 0, %v968
        %v970 = vrot.slane %v965, %v969
        %972 = vmatprep.subr.mxu0 0.0
        %973 = vmatpush1.msra.mxu0 %v964
        %974 = vmatprep.subr.mxu0 0.0
        %975 = vmatpush1.msra.mxu0 %v963
        %976 = vmatprep.subr.mxu0 0.0
        %977 = vmatpush1.msra.mxu0 %v962
        %978 = vmatprep.subr.mxu0 0.0
        %979 = vmatpush1.msra.mxu0 %v961
        %980 = vmatprep.subr.mxu0 0.0
        %981 = vmatpush1.msra.mxu0 %v960
        %982 = vmatprep.subr.mxu0 0.0
        %983 = vmatpush1.msra.mxu0 %v959
        %984 = vmatprep.subr.mxu0 0.0
        %985 = vmatpush1.msra.mxu0 %v958
        %986 = vmatprep.subr.mxu0 0.0
        %987 = vmatpush1.msra.mxu0 %v957
        %988 = vmatprep.subr.mxu0 0.0
        %989 = vmatpush1.msra.mxu0 %v956
        %990 = vmatprep.subr.mxu0 0.0
        %991 = vmatpush1.msra.mxu0 %v955
        %992 = vmatprep.subr.mxu0 0.0
        %993 = vmatpush1.msra.mxu0 %v954
        %994 = vmatprep.subr.mxu0 0.0
        %995 = vmatpush1.msra.mxu0 %v953
        %996 = vmatprep.subr.mxu0 0.0
        %997 = vmatpush1.msra.mxu0 %v952
        %998 = vmatprep.subr.mxu0 0.0
        %999 = vmatpush1.msra.mxu0 %v951
        %1000 = vmatprep.subr.mxu0 0.0
        %1001 = vmatpush1.msra.mxu0 %v950
        %1002 = vmatprep.subr.mxu0 0.0
        %1003 = vmatpush1.msra.mxu0 %v949
        %1004 = vmatprep.subr.mxu0 0.0
        %1005 = vmatpush2.msra.mxu0 0.0
        %1006 = vmatprep.subr.mxu0 0.0
        %1007 = vmatpush2.msra.mxu0 0.0
        %1008 = vmatprep.subr.mxu0 0.0
        %1009 = vmatpush2.msra.mxu0 0.0
        %1010 = vmatprep.subr.mxu0 0.0
        %1011 = vmatpush2.msra.mxu0 0.0
        %1012 = vmatprep.subr.mxu0 0.0
        %1013 = vmatpush2.msra.mxu0 0.0
        %1014 = vmatprep.subr.mxu0 0.0
        %1015 = vmatpush2.msra.mxu0 0.0
        %1016 = vmatprep.subr.mxu0 0.0
        %1017 = vmatpush2.msra.mxu0 0.0
        %1018 = vmatprep.subr.mxu0 0.0
        %1019 = vmatpush2.msra.mxu0 0.0
        %1020 = vmatprep.subr.mxu0 0.0
        %1021 = vmatpush2.msra.mxu0 0.0
        %1022 = vmatprep.subr.mxu0 0.0
        %1023 = vmatpush2.msra.mxu0 0.0
        %1024 = vmatprep.subr.mxu0 0.0
        %1025 = vmatpush2.msra.mxu0 0.0
        %1026 = vmatprep.subr.mxu0 0.0
        %1027 = vmatpush2.msra.mxu0 0.0
        %1028 = vmatprep.subr.mxu0 0.0
        %1029 = vmatpush2.msra.mxu0 0.0
        %1030 = vmatprep.subr.mxu0 0.0
        %1031 = vmatpush2.msra.mxu0 0.0
        %1032 = vmatprep.subr.mxu0 0.0
        %1033 = vmatpush2.msra.mxu0 0.0
        %1034 = vmatprep.subr.mxu0 0.0
        %1035 = vmatpush2.msra.mxu0 0.0
        %1036 = vmatprep.mubr.f32.mxu0 0.0
        %1037 = vmatmul.mubr.f32.gmra.mxu0 %v948
        %v1038 = vpop.f32.mrf.mxu0
        %v1039 = vadd.f32 %v970, %v1038
        %v1040 = vpop.f32.mrf.mxu0
        %1041 = vdwg.mxu0
        %1042 = vst [vmem:[%s419] sm:$0xff] %v1039
        %s1043 = sand.u32 %s292, 1
        %s1044 = scalar_lea.sflag [#allocation4], %s1043
        %s1045 = sand.u32 %s292, 1
        %s1046 = smul.addr %s1045, 8
        %s1047 = scalar_lea.vmem [#allocation5], %s1046
        // Predicated region
        $region73: #{tpu_custom_call.1} parent=67 // pred_check
          %p1048 = pneg %p302
        $region74: #{tpu_custom_call.1} parent=67 // pred_check_branch
          %1050 = sbr.rel (%p1048) target = $region76
        $region75: #{tpu_custom_call.1} parent=67 // pred_region
          %s1052 = ssub.s32 128, 128
          %1053 = vsyncadd %s1044, %s1052
          %s1054 = smul.addr %s27, 128
          %s1055 = scalar_lea.hbm %s12, %s1054
          %s1057 = sshll.u32 %s1047, 4
          %s1058 = int_to_ptr.vmem [resolvable:$true] %s1057
          %1060 = dma.vmem_to_hbm [thread:$0]  %s1058, 128, %s1055, %s1044
        $region76: #{tpu_custom_call.1} parent=67 // pred_fallthru
          _
      $region68: #{tpu_custom_call.1} parent=5 // pred_fallthru
        _
      %p1061 = scmp.le.s32.totalorder 2, %s22
      // Predicated region
      $region77: #{tpu_custom_call.1} parent=5 // pred_check
        %p1062 = pneg %p1061
      $region78: #{tpu_custom_call.1} parent=5 // pred_check_branch
        %1064 = sbr.rel (%p1062) target = $region80
      $region79: #{tpu_custom_call.1} parent=5 // pred_region
        %s1065 = ssub.s32 %s22, 2
        // Predicated region
        $region81: #{tpu_custom_call.1} parent=79 // pred_check
          %p1066 = pneg %p308
        $region82: #{tpu_custom_call.1} parent=79 // pred_check_branch
          %1068 = sbr.rel (%p1066) target = $region84
        $region83: #{tpu_custom_call.1} parent=79 // pred_region
          %s1069 = sand.u32 %s293, 1
          %s1070 = scalar_lea.sflag [#allocation4], %s1069
          %s1071 = sand.u32 %s293, 1
          %s1072 = smul.addr %s1071, 8
          %s1073 = scalar_lea.vmem [#allocation5], %s1072
          %1074 = dma.done %s1070, 128
        $region84: #{tpu_custom_call.1} parent=79 // pred_fallthru
          _
      $region80: #{tpu_custom_call.1} parent=5 // pred_fallthru
        _
    $region6: #{tpu_custom_call.1} parent=1 // loop_footer
      %s26 = sadd.s32 1, %s22
    $region7: #{tpu_custom_call.1} parent=1 // loop_footer_branch
      %21 = sbr.rel target = $region3
    $region8: #{tpu_custom_call.1} parent=1 // loop_exit
      _
    %1075 = vsyncpa [#allocation3], 1
    %s1076 = scalar_lea.sflag [#allocation3], 1
    %1077 = vsyncpa %s1076, 1
    %1078 = vsyncpa [#allocation4], 1
    %s1079 = scalar_lea.sflag [#allocation4], 1
    %1080 = vsyncpa %s1079, 1

</llo_original>
